<compile_context>
chip_gen: v5e
topology: v5e:2x2
jax: 0.10.0
libtpu: 0.0.40
codegen_flags: <defaults>
</compile_context>

<pallas_src>
import numpy as np
import jax
import jax.numpy as jnp
from jax.experimental import pallas as pl
from jax.experimental.pallas import tpu as pltpu


def _round_half_up(v):
    # round-to-nearest, ties up. Matches torch.round except at exactly
    # representable .5 ties (measure-zero for this data).
    return jnp.floor(v + 0.5)


def _dmd_kernel(params_ref, xr_ref, xi_ref, mask_ref, out_ref):
    """One grid step processes a group of whole flattened images.

    params_ref : SMEM (2,)     f32  -> [alpha, beta]
    xr_ref     : VMEM (Bt, HW) f32  real part of the complex input field
    xi_ref     : VMEM (Bt, HW) f32  imag part of the complex input field
    mask_ref   : VMEM (1, HW)  f32  flattened DMD aperture mask (broadcast over rows)
    out_ref    : VMEM (Bt, HW) f32  real part of the output (imag is identically 0)
    """
    alpha = params_ref[0]
    beta = params_ref[1]

    xr = xr_ref[...]
    xi = xi_ref[...]
    m = mask_ref[...]                                   # (1, HW), broadcasts over rows

    # Sensor: tanh(|x|^2)   (EUP). Argument >= 0, so tanh is already in [0, 1)
    # and the dorefa clamp is a no-op.
    inten = jnp.tanh(xr * xr + xi * xi)
    # dorefa_a(., 8): round(v * 255) / 255
    inten = _round_half_up(inten * 255.0) * (1.0 / 255.0)
    # DMD aperture
    inten = inten * m
    # Per-image adaptive threshold: mean over the whole (H, W) plane (XLU reduce).
    i_th = jnp.mean(inten, axis=-1, keepdims=True)      # (Bt, 1)
    z = beta * (inten - alpha * i_th)
    # dorefa_a(sigmoid(z), 1): round(clamp(sigmoid(z), 0, 1)) == (sigmoid(z) >= 0.5)
    #                         == (z >= 0). Fusing the final mask multiply:
    #   y * mask == where(z >= 0, mask, 0).
    out_ref[...] = jnp.where(z >= 0.0, m, 0.0)


def _choose_row_block(B, HW):
    """Rows (whole flattened images) per grid step.

    Constraints:
      * each block must hold whole rows (the threshold is a per-image mean),
      * the sublane (row) dim must be a multiple of 8 or equal to B,
      * ~4-5 MiB per operand tile so 3 operands x 2 buffers + the full-block
        `inten` intermediate stay well under the 48 MiB VMEM limit (v7x-safe),
      * at least ~4 grid steps when B allows it (pipeline overlap + v7x megacore).
    """
    if B <= 8:
        # Tiny batch: B itself is the only legal row count (multiple-of-8 rule);
        # the pipelining loss is negligible at this size.
        return B
    row_bytes = HW * 4
    target = max(8, ((5 << 20) // row_bytes) // 8 * 8)   # ~5 MiB tile, multiple of 8
    cap = max(8, (((B + 3) // 4) + 7) // 8 * 8)          # keeps grid length >= ~4 (>= 2)
    return min(target, cap)


def dmd_forward(x_re, x_im, mask, alpha=1.0, beta=10.0, pack_complex=False):
    """x_re, x_im: (B, H, W) float32 (real/imag of complex input field).
    mask: (H, W) float32.

    Returns the (B, H, W) real output plane (f32); the imaginary part of the
    module's complex output is identically 0.  Pass pack_complex=True to get a
    complex64 array matching the PyTorch module's return type (costs one extra
    full HBM pass, so it is off by default).
    """
    B, H, W = x_re.shape
    assert mask.shape == (H, W)
    HW = H * W

    xr = x_re.reshape(B, HW)
    xi = x_im.reshape(B, HW)
    m = mask.reshape(1, HW).astype(jnp.float32)
    params = jnp.asarray([alpha, beta], dtype=jnp.float32)

    bt = _choose_row_block(B, HW)
    grid = (pl.cdiv(B, bt),)

    row_spec = pl.BlockSpec((bt, HW), lambda i, p: (i, 0))
    mask_spec = pl.BlockSpec((1, HW), lambda i, p: (0, 0))   # constant -> stays resident

    # Purely mem-bound: ~14 VPU flops + 1 transcendental (tanh) per element,
    # 3 f32 planes of HBM traffic (xr, xi, out) + the mask + 2 scalars.
    cost = pl.CostEstimate(
        flops=14 * B * HW,
        transcendentals=B * HW,
        bytes_accessed=3 * B * HW * 4 + HW * 4 + 8,
    )

    out_flat = pl.pallas_call(
        _dmd_kernel,
        out_shape=jax.ShapeDtypeStruct((B, HW), jnp.float32),
        grid_spec=pltpu.PrefetchScalarGridSpec(
            num_scalar_prefetch=1,
            grid=grid,
            in_specs=[row_spec, row_spec, mask_spec],
            out_specs=row_spec,
        ),
        compiler_params=pltpu.CompilerParams(
            dimension_semantics=("parallel",),
            vmem_limit_bytes=48 * 1024 * 1024,   # fits v7x (64 MiB) with headroom
        ),
        cost_estimate=cost,
    )(params, xr, xi, m)

    out_re = out_flat.reshape(B, H, W)
    if pack_complex:
        # Matches the PyTorch module's complex64 return. This is a separate XLA
        # pass (~12 B/elem of extra HBM traffic); use only when the consumer
        # genuinely needs a complex array.
        return jax.lax.complex(out_re, jnp.zeros_like(out_re))
    return out_re


def create_mask(whole_dim, phase_dim):
    """Identical to DMD.create_mask."""
    pad = (whole_dim - phase_dim) // 2
    mask = np.zeros((whole_dim, whole_dim), dtype=np.float32)
    mask[pad:pad + phase_dim, pad:pad + phase_dim] = 1.0
    return jnp.asarray(mask)


def dmd_reference(x_re, x_im, mask, alpha=1.0, beta=10.0):
    """Plain-JAX reference of the DMD forward (returns the real output plane)."""
    inten = jnp.tanh(x_re * x_re + x_im * x_im)
    inten = _round_half_up(jnp.clip(inten, 0.0, 1.0) * 255.0) / 255.0
    inten = inten * mask[None]
    i_th = jnp.mean(inten, axis=(-2, -1), keepdims=True)
    z = beta * (inten - alpha * i_th)
    s = 1.0 / (1.0 + jnp.exp(-z))
    y = _round_half_up(jnp.clip(s, 0.0, 1.0))
    return y * mask[None]


if __name__ == "__main__":
    whole_dim = 64
    phase_dim = 48
    batch = 16          # small, but > 8 so the multi-step (pipelined) grid path is exercised

    mask = create_mask(whole_dim, phase_dim)

    key = jax.random.PRNGKey(0)
    k1, k2 = jax.random.split(key)
    x_re = jax.random.normal(k1, (batch, whole_dim, whole_dim), dtype=jnp.float32)
    x_im = jax.random.normal(k2, (batch, whole_dim, whole_dim), dtype=jnp.float32)

    out_re = dmd_forward(x_re, x_im, mask)
    out_re = jax.block_until_ready(out_re)

    out_np = np.asarray(out_re)
    ref_re = np.asarray(dmd_reference(x_re, x_im, mask))

    # The binarization itself is now an exact compare, but tanh ULP differences
    # between the Pallas EUP path and XLA's reference can still shift a pixel
    # sitting exactly on an 8-bit quantization-bin / threshold boundary, so a
    # vanishing number of single-pixel flips is allowed.
    diff = np.abs(out_np - ref_re)
    n_mismatch = int((diff > 1e-4).sum())
    assert n_mismatch <= max(2, out_np.size // 10000), (
        f"{n_mismatch} mismatching pixels vs reference")

    # Output must be a {0,1} map and exactly zero outside the DMD aperture.
    assert set(np.unique(out_np)).issubset({0.0, 1.0})
    np.testing.assert_allclose(out_np * (1.0 - np.asarray(mask))[None], 0.0, atol=0.0)

    # Optional module-faithful complex64 return: imaginary part exactly zero,
    # real part identical to the planar output.
    out_c = jax.block_until_ready(dmd_forward(x_re, x_im, mask, pack_complex=True))
    np.testing.assert_allclose(np.asarray(jnp.imag(out_c)), 0.0, atol=0.0)
    np.testing.assert_array_equal(np.asarray(jnp.real(out_c)), out_np)

    print("KERNEL_OK")
</pallas_src>

<mosaic_0001>
module attributes {stable_mosaic.version = 11 : i64} {
  func.func @_dmd_kernel(%arg0: i32, %arg1: memref<2xf32, #tpu.memory_space<smem>>, %arg2: memref<8x4096xf32, #tpu.memory_space<vmem>>, %arg3: memref<8x4096xf32, #tpu.memory_space<vmem>>, %arg4: memref<1x4096xf32, #tpu.memory_space<vmem>>, %arg5: memref<8x4096xf32, #tpu.memory_space<vmem>>) attributes {dimension_semantics = [#tpu.dimension_semantics<parallel>], iteration_bounds = array<i64: 2>, scalar_prefetch = 1 : i64, scratch_operands = 0 : i64, tpu.core_type = #tpu.core_type<tc>, window_params = [{transform_indices = @transform_0, window_bounds = array<i64: 8, 4096>}, {transform_indices = @transform_1, window_bounds = array<i64: 8, 4096>}, {pipeline_mode = #tpu.pipeline_mode<synchronous>, transform_indices = @transform_2, window_bounds = array<i64: 1, 4096>}, {transform_indices = @transform_3, window_bounds = array<i64: 8, 4096>}]} {
    %c0 = arith.constant 0 : index
    %0 = memref.load %arg1[%c0] : memref<2xf32, #tpu.memory_space<smem>>
    %c1 = arith.constant 1 : index
    %1 = memref.load %arg1[%c1] : memref<2xf32, #tpu.memory_space<smem>>
    %c0_0 = arith.constant 0 : index
    %c0_1 = arith.constant 0 : index
    %2 = vector.load %arg2[%c0_0, %c0_1] : memref<8x4096xf32, #tpu.memory_space<vmem>>, vector<8x4096xf32>
    %c0_2 = arith.constant 0 : index
    %c0_3 = arith.constant 0 : index
    %3 = vector.load %arg3[%c0_2, %c0_3] : memref<8x4096xf32, #tpu.memory_space<vmem>>, vector<8x4096xf32>
    %c0_4 = arith.constant 0 : index
    %c0_5 = arith.constant 0 : index
    %4 = vector.load %arg4[%c0_4, %c0_5] : memref<1x4096xf32, #tpu.memory_space<vmem>>, vector<1x4096xf32>
    %5 = arith.mulf %2, %2 : vector<8x4096xf32>
    %6 = arith.mulf %3, %3 : vector<8x4096xf32>
    %7 = arith.addf %5, %6 : vector<8x4096xf32>
    %8 = math.tanh %7 : vector<8x4096xf32>
    %cst = arith.constant 2.550000e+02 : f32
    %9 = vector.broadcast %cst : f32 to vector<8x4096xf32>
    %10 = arith.mulf %8, %9 : vector<8x4096xf32>
    %cst_6 = arith.constant 5.000000e-01 : f32
    %11 = vector.broadcast %cst_6 : f32 to vector<8x4096xf32>
    %12 = arith.addf %10, %11 : vector<8x4096xf32>
    %13 = math.floor %12 : vector<8x4096xf32>
    %cst_7 = arith.constant 0.00392156886 : f32
    %14 = vector.broadcast %cst_7 : f32 to vector<8x4096xf32>
    %15 = arith.mulf %13, %14 : vector<8x4096xf32>
    %16 = vector.broadcast %4 : vector<1x4096xf32> to vector<8x4096xf32>
    %17 = arith.mulf %15, %16 : vector<8x4096xf32>
    %cst_8 = arith.constant dense<0.000000e+00> : vector<8xf32>
    %18 = vector.multi_reduction <add>, %17, %cst_8 [1] : vector<8x4096xf32> to vector<8xf32>
    %19 = vector.shape_cast %18 : vector<8xf32> to vector<8x1xf32>
    %cst_9 = arith.constant 4.096000e+03 : f32
    %20 = vector.broadcast %cst_9 : f32 to vector<8x1xf32>
    %21 = arith.divf %19, %20 : vector<8x1xf32>
    %22 = vector.broadcast %0 : f32 to vector<8x1xf32>
    %23 = arith.mulf %22, %21 : vector<8x1xf32>
    %24 = vector.broadcast %23 : vector<8x1xf32> to vector<8x4096xf32>
    %25 = arith.subf %17, %24 : vector<8x4096xf32>
    %26 = vector.broadcast %1 : f32 to vector<8x4096xf32>
    %27 = arith.mulf %26, %25 : vector<8x4096xf32>
    %cst_10 = arith.constant 0.000000e+00 : f32
    %28 = vector.broadcast %cst_10 : f32 to vector<8x4096xf32>
    %29 = arith.cmpf oge, %27, %28 : vector<8x4096xf32>
    %cst_11 = arith.constant 0.000000e+00 : f32
    %30 = vector.shape_cast %4 : vector<1x4096xf32> to vector<1x4096xf32>
    %31 = vector.broadcast %30 : vector<1x4096xf32> to vector<8x4096xf32>
    %32 = vector.broadcast %cst_11 : f32 to vector<8x4096xf32>
    %33 = arith.select %29, %31, %32 : vector<8x4096xi1>, vector<8x4096xf32>
    %c0_12 = arith.constant 0 : index
    %c0_13 = arith.constant 0 : index
    %34 = vector.load %arg5[%c0_12, %c0_13] : memref<8x4096xf32, #tpu.memory_space<vmem>>, vector<8x4096xf32>
    tpu.vector_store %arg5[%c0_12, %c0_13], %33 {strides = array<i32>} : memref<8x4096xf32, #tpu.memory_space<vmem>>, vector<8x4096xf32>,
    return
  }
  func.func @transform_0(%arg0: i32, %arg1: memref<2xf32, #tpu.memory_space<smem>>) -> (i32, i32) {
    %c0_i32 = arith.constant 0 : i32
    %c0_i32_0 = arith.constant 0 : i32
    return %arg0, %c0_i32 : i32, i32
  }
  func.func @transform_1(%arg0: i32, %arg1: memref<2xf32, #tpu.memory_space<smem>>) -> (i32, i32) {
    %c0_i32 = arith.constant 0 : i32
    %c0_i32_0 = arith.constant 0 : i32
    return %arg0, %c0_i32 : i32, i32
  }
  func.func @transform_2(%arg0: i32, %arg1: memref<2xf32, #tpu.memory_space<smem>>) -> (i32, i32) {
    %c0_i32 = arith.constant 0 : i32
    %c0_i32_0 = arith.constant 0 : i32
    %c0_i32_1 = arith.constant 0 : i32
    return %c0_i32, %c0_i32_0 : i32, i32
  }
  func.func @transform_3(%arg0: i32, %arg1: memref<2xf32, #tpu.memory_space<smem>>) -> (i32, i32) {
    %c0_i32 = arith.constant 0 : i32
    %c0_i32_0 = arith.constant 0 : i32
    return %arg0, %c0_i32 : i32, i32
  }
}

</mosaic_0001>

<llo_original>
// kernel: tpu_custom_call.1
$region0: #{tpu_custom_call.1}
  #allocation0 [shape = 'u32[]', space=smem, size = 0x4, offset = 0x4, fixed_abs, tag = 'smem constant byte address 0x4 - core index']
  #allocation1 [shape = 'u32[72,128]{1,0:T(1,128)}', space=vmem, size = 0x9000, scoped, tag = 'internal scratch']
  #allocation2 [shape = 's32[1]{0}', space=sflag, size = 0x4, scoped, tag = 'scoped memory for tpu_custom_call.1']
  #allocation3 [shape = 'u8[512]{0}', space=smem, size = 0x200, scoped, tag = 'prefetched SMEM operand 0']
  %s0 = inlined_call_operand.hbm [shape: f32[2], index: 0, kind: input, shape index: {}]
  %s1 = inlined_call_operand.hbm [shape: f32[16,4096], index: 1, kind: input, shape index: {}]
  %s2 = inlined_call_operand.hbm [shape: f32[16,4096], index: 2, kind: input, shape index: {}]
  %s3 = inlined_call_operand.hbm [shape: f32[1,4096], index: 3, kind: input, shape index: {}]
  %s4 = inlined_call_operand.hbm [shape: f32[16,4096], index: 4, kind: output, shape index: {}]
  %s5 = sld [smem:[#allocation0]]
  $region57: #{tpu_custom_call.1} parent=0
    _
  %s7 = ssub.s32 1, %s5
  %s8 = scalar_select 0, %s7, %s5
  %s10 = sshll.u32 %s0, 4
  %s11 = int_to_ptr.hbm [resolvable:$true] %s10
  %13 = dma.hbm_to_smem %s11, 16, [#allocation3], [#allocation2]
  %15 = dma.done [#allocation2], 16
  %16 = sfence
  $region1: #{tpu_custom_call.1} parent=0
    #allocation4 [shape = 'u8[262144]{0}', space=vmem, size = 0x40000, scoped, tag = 'input window, operand 1']
    #allocation5 [shape = 's32[2]{0}', space=sflag, size = 0x8, scoped, tag = 'scoped memory for tpu_custom_call.1']
    #allocation6 [shape = 's32[2]{0}', space=sflag, size = 0x8, scoped, tag = 'scoped memory for tpu_custom_call.1']
    #allocation7 [shape = 'u8[262144]{0}', space=vmem, size = 0x40000, scoped, tag = 'input window, operand 2']
    #allocation8 [shape = 's32[2]{0}', space=sflag, size = 0x8, scoped, tag = 'scoped memory for tpu_custom_call.1']
    #allocation9 [shape = 'u8[16384]{0}', space=vmem, size = 0x4000, scoped, tag = 'input window, operand 3, single buffered']
    #allocation10 [shape = 'u8[262144]{0}', space=vmem, size = 0x40000, scoped, tag = 'output window, operand 0']
    %17 = vsyncpa [#allocation5], 0
    %s18 = scalar_lea.sflag [#allocation5], 1
    %19 = vsyncpa %s18, 0
    %20 = vsyncpa [#allocation8], 0
    %s21 = scalar_lea.sflag [#allocation8], 1
    %22 = vsyncpa %s21, 0
    %23 = vsyncpa [#allocation6], 0
    %s24 = scalar_lea.sflag [#allocation6], 1
    %25 = vsyncpa %s24, 0
    loop: start=0, step=1, limit=4
    $region2: #{tpu_custom_call.1} parent=1 // loop_pre_header
      _
    $region3: #{tpu_custom_call.1} parent=1 // loop_header
      %s27 = sphi 0, %s31
      %p28 = scmp.ge.s32.totalorder %s27, 4
      %s37 = sphi 0, %s39
      %s40 = sphi 0, %s37
      %s41 = sphi 0, %s40
      %s57 = sphi 0, %s41
      %s63 = sphi 0, %s65
      %s66 = sphi 0, %s63
      %s67 = sphi 0, %s66
      %s83 = sphi 0, %s67
      %s87 = sphi 0, %s87
      %s89 = sphi 0, %s87
      %s90 = sphi 0, %s89
      %s104 = sphi 0, %s90
      %s110 = sphi 0, %s112
      %s113 = sphi 0, %s110
      %s114 = sphi 0, %s113
      %s130 = sphi 0, %s114
    $region4: #{tpu_custom_call.1} parent=1 // loop_header_branch
      %30 = sbr.rel (%p28) target = $region8
    $region5: #{tpu_custom_call.1} parent=1 // loop_body
      %s32 = ssub.s32 %s27, 1
      %s33 = ssub.s32 %s27, 2
      %s34 = sadd.s32 %s27, 1
      %s35 = ssub.s32 %s27, %s34
      %p36 = scmp.eq.s32.totalorder %s35, 0
      %s38 = sadd.s32 %s37, 1
      %s39 = scalar_select %p36, %s37, %s38
      %p42 = pneg %p36
      %p43 = scmp.eq.s32.totalorder %s27, 1
      %p44 = por %p42, %p43
      %p45 = scmp.ne.s32.totalorder %s37, %s40
      %p46 = scmp.eq.s32.totalorder %s27, 0
      %p47 = por %p45, %p46
      %p48 = scmp.ne.s32.totalorder %s37, %s40
      %p49 = scmp.eq.s32.totalorder %s32, 1
      %p50 = por %p48, %p49
      %p51 = scmp.ne.s32.totalorder %s40, %s41
      %p52 = scmp.eq.s32.totalorder %s32, 0
      %p53 = por %p51, %p52
      %p54 = scmp.ne.s32.totalorder %s40, %s41
      %p55 = scmp.eq.s32.totalorder %s33, 1
      %p56 = por %p54, %p55
      %p58 = scmp.ne.s32.totalorder %s41, %s57
      %p59 = scmp.eq.s32.totalorder %s33, 0
      %p60 = por %p58, %p59
      %s61 = ssub.s32 %s27, %s34
      %p62 = scmp.eq.s32.totalorder %s61, 0
      %s64 = sadd.s32 %s63, 1
      %s65 = scalar_select %p62, %s63, %s64
      %p68 = pneg %p62
      %p69 = scmp.eq.s32.totalorder %s27, 1
      %p70 = por %p68, %p69
      %p71 = scmp.ne.s32.totalorder %s63, %s66
      %p72 = scmp.eq.s32.totalorder %s27, 0
      %p73 = por %p71, %p72
      %p74 = scmp.ne.s32.totalorder %s63, %s66
      %p75 = scmp.eq.s32.totalorder %s32, 1
      %p76 = por %p74, %p75
      %p77 = scmp.ne.s32.totalorder %s66, %s67
      %p78 = scmp.eq.s32.totalorder %s32, 0
      %p79 = por %p77, %p78
      %p80 = scmp.ne.s32.totalorder %s66, %s67
      %p81 = scmp.eq.s32.totalorder %s33, 1
      %p82 = por %p80, %p81
      %p84 = scmp.ne.s32.totalorder %s67, %s83
      %p85 = scmp.eq.s32.totalorder %s33, 0
      %p86 = por %p84, %p85
      %s88 = sadd.s32 %s87, 1
      %p91 = scmp.eq.s32.totalorder %s27, 1
      %p92 = scmp.ne.s32.totalorder %s87, %s89
      %p93 = scmp.eq.s32.totalorder %s27, 0
      %p94 = por %p92, %p93
      %p95 = scmp.ne.s32.totalorder %s87, %s89
      %p96 = scmp.eq.s32.totalorder %s32, 1
      %p97 = por %p95, %p96
      %p98 = scmp.ne.s32.totalorder %s89, %s90
      %p99 = scmp.eq.s32.totalorder %s32, 0
      %p100 = por %p98, %p99
      %p101 = scmp.ne.s32.totalorder %s89, %s90
      %p102 = scmp.eq.s32.totalorder %s33, 1
      %p103 = por %p101, %p102
      %p105 = scmp.ne.s32.totalorder %s90, %s104
      %p106 = scmp.eq.s32.totalorder %s33, 0
      %p107 = por %p105, %p106
      %s108 = ssub.s32 %s27, %s34
      %p109 = scmp.eq.s32.totalorder %s108, 0
      %s111 = sadd.s32 %s110, 1
      %s112 = scalar_select %p109, %s110, %s111
      %p115 = pneg %p109
      %p116 = scmp.eq.s32.totalorder %s27, 1
      %p117 = por %p115, %p116
      %p118 = scmp.ne.s32.totalorder %s110, %s113
      %p119 = scmp.eq.s32.totalorder %s27, 0
      %p120 = por %p118, %p119
      %p121 = scmp.ne.s32.totalorder %s110, %s113
      %p122 = scmp.eq.s32.totalorder %s32, 1
      %p123 = por %p121, %p122
      %p124 = scmp.ne.s32.totalorder %s113, %s114
      %p125 = scmp.eq.s32.totalorder %s32, 0
      %p126 = por %p124, %p125
      %p127 = scmp.ne.s32.totalorder %s113, %s114
      %p128 = scmp.eq.s32.totalorder %s33, 1
      %p129 = por %p127, %p128
      %p131 = scmp.ne.s32.totalorder %s114, %s130
      %p132 = scmp.eq.s32.totalorder %s33, 0
      %p133 = por %p131, %p132
      %p134 = scmp.le.s32.totalorder 1, %s27
      %p135 = scmp.lt.s32.totalorder %s27, 3
      %p136 = pnand %p134, %p135
      %p137 = pneg %p136
      // Predicated region
      $region9: #{tpu_custom_call.1} parent=5 // pred_check
        _
      $region10: #{tpu_custom_call.1} parent=5 // pred_check_branch
        %139 = sbr.rel (%p136) target = $region12
      $region11: #{tpu_custom_call.1} parent=5 // pred_region
        %s140 = ssub.s32 %s27, 1
        // Predicated region
        $region13: #{tpu_custom_call.1} parent=11 // pred_check
          %p141 = pneg %p100
        $region14: #{tpu_custom_call.1} parent=11 // pred_check_branch
          %143 = sbr.rel (%p141) target = $region16
        $region15: #{tpu_custom_call.1} parent=11 // pred_region
          %145 = vsyncadd [#allocation8], 0
          %s147 = sshll.u32 %s3, 4
          %s148 = int_to_ptr.hbm [resolvable:$true] %s147
          %s149 = sshll.u32 [#allocation9], 4
          %s150 = int_to_ptr.vmem [resolvable:$true] %s149
          %152 = dma.hbm_to_vmem [thread:$0]  %s148, 512, %s150, [#allocation8]
        $region16: #{tpu_custom_call.1} parent=11 // pred_fallthru
          _
      $region12: #{tpu_custom_call.1} parent=5 // pred_fallthru
        _
      %p153 = scmp.lt.s32.totalorder %s27, 2
      // Predicated region
      $region17: #{tpu_custom_call.1} parent=5 // pred_check
        %p154 = pneg %p153
      $region18: #{tpu_custom_call.1} parent=5 // pred_check_branch
        %156 = sbr.rel (%p154) target = $region20
      $region19: #{tpu_custom_call.1} parent=5 // pred_region
        // Predicated region
        $region21: #{tpu_custom_call.1} parent=19 // pred_check
          %p157 = pneg %p47
        $region22: #{tpu_custom_call.1} parent=19 // pred_check_branch
          %159 = sbr.rel (%p157) target = $region24
        $region23: #{tpu_custom_call.1} parent=19 // pred_region
          %s160 = sand.u32 %s37, 1
          %s161 = scalar_lea.sflag [#allocation5], %s160
          %s162 = sand.u32 %s37, 1
          %s163 = smul.addr %s162, 256
          %s164 = scalar_lea.vmem [#allocation4], %s163
          %166 = vsyncadd %s161, 0
          %s167 = smul.addr %s27, 32
          %s168 = smul.addr %s167, 8
          %s169 = scalar_lea.hbm %s1, %s168
          %s171 = sshll.u32 %s169, 4
          %s172 = int_to_ptr.hbm [resolvable:$true] %s171
          %s173 = sshll.u32 %s164, 4
          %s174 = int_to_ptr.vmem [resolvable:$true] %s173
          %176 = dma.hbm_to_vmem [thread:$0]  %s172, 4096, %s174, %s161
        $region24: #{tpu_custom_call.1} parent=19 // pred_fallthru
          _
        // Predicated region
        $region25: #{tpu_custom_call.1} parent=19 // pred_check
          %p177 = pneg %p73
        $region26: #{tpu_custom_call.1} parent=19 // pred_check_branch
          %179 = sbr.rel (%p177) target = $region28
        $region27: #{tpu_custom_call.1} parent=19 // pred_region
          %s180 = sand.u32 %s27, 1
          %s181 = scalar_lea.sflag [#allocation8], %s180
          %s182 = sand.u32 %s63, 1
          %s183 = smul.addr %s182, 256
          %s184 = scalar_lea.vmem [#allocation7], %s183
          %186 = vsyncadd %s181, 0
          %s187 = smul.addr %s27, 32
          %s188 = smul.addr %s187, 8
          %s189 = scalar_lea.hbm %s2, %s188
          %s191 = sshll.u32 %s189, 4
          %s192 = int_to_ptr.hbm [resolvable:$true] %s191
          %s193 = sshll.u32 %s184, 4
          %s194 = int_to_ptr.vmem [resolvable:$true] %s193
          %196 = dma.hbm_to_vmem [thread:$0]  %s192, 4096, %s194, %s181
        $region28: #{tpu_custom_call.1} parent=19 // pred_fallthru
          _
      $region20: #{tpu_custom_call.1} parent=5 // pred_fallthru
        _
      %p197 = scmp.le.s32.totalorder 1, %s27
      %p198 = scmp.lt.s32.totalorder %s27, 3
      %p199 = pnand %p197, %p198
      %p200 = pneg %p199
      // Predicated region
      $region29: #{tpu_custom_call.1} parent=5 // pred_check
        _
      $region30: #{tpu_custom_call.1} parent=5 // pred_check_branch
        %202 = sbr.rel (%p199) target = $region32
      $region31: #{tpu_custom_call.1} parent=5 // pred_region
        %s203 = ssub.s32 %s27, 1
        %s204 = sand.u32 %s40, 1
        %s205 = scalar_lea.sflag [#allocation5], %s204
        %s206 = sand.u32 %s40, 1
        %s207 = smul.addr %s206, 256
        %s208 = scalar_lea.vmem [#allocation4], %s207
        // Predicated region
        $region33: #{tpu_custom_call.1} parent=31 // pred_check
          %p209 = pneg %p53
        $region34: #{tpu_custom_call.1} parent=31 // pred_check_branch
          %211 = sbr.rel (%p209) target = $region36
        $region35: #{tpu_custom_call.1} parent=31 // pred_region
          %213 = dma.done %s205, 4096
        $region36: #{tpu_custom_call.1} parent=31 // pred_fallthru
          _
        %s214 = sand.u32 %s32, 1
        %s215 = scalar_lea.sflag [#allocation8], %s214
        %s216 = sand.u32 %s66, 1
        %s217 = smul.addr %s216, 256
        %s218 = scalar_lea.vmem [#allocation7], %s217
        // Predicated region
        $region37: #{tpu_custom_call.1} parent=31 // pred_check
          %p219 = pneg %p79
        $region38: #{tpu_custom_call.1} parent=31 // pred_check_branch
          %221 = sbr.rel (%p219) target = $region40
        $region39: #{tpu_custom_call.1} parent=31 // pred_region
          %223 = dma.done %s215, 4096
        $region40: #{tpu_custom_call.1} parent=31 // pred_fallthru
          _
        // Predicated region
        $region41: #{tpu_custom_call.1} parent=31 // pred_check
          %p224 = pneg %p100
        $region42: #{tpu_custom_call.1} parent=31 // pred_check_branch
          %226 = sbr.rel (%p224) target = $region44
        $region43: #{tpu_custom_call.1} parent=31 // pred_region
          %228 = dma.done [#allocation8], 512
        $region44: #{tpu_custom_call.1} parent=31 // pred_fallthru
          _
        %s229 = sand.u32 %s40, 1
        %s230 = scalar_lea.sflag [#allocation5], %s229
        %s231 = sand.u32 %s40, 1
        %s232 = smul.addr %s231, 256
        %s233 = scalar_lea.vmem [#allocation4], %s232
        %p234 = pneg %p53
        %p235 = pneg %p50
        %s236 = sand.u32 %s32, 1
        %s237 = scalar_lea.sflag [#allocation8], %s236
        %s238 = sand.u32 %s66, 1
        %s239 = smul.addr %s238, 256
        %s240 = scalar_lea.vmem [#allocation7], %s239
        %p241 = pneg %p79
        %p242 = pneg %p76
        %p243 = pneg %p100
        %p244 = pneg %p97
        %p245 = pneg %p126
        %p246 = pneg %p123
        %s247 = sand.u32 %s113, 1
        %s248 = scalar_lea.sflag [#allocation6], %s247
        %s249 = sand.u32 %s113, 1
        %s250 = smul.addr %s249, 256
        %s251 = scalar_lea.vmem [#allocation10], %s250
        %s252 = sld [smem:[#allocation3]]
        %s253 = sld [smem:[#allocation3 + $0x1]]
        %v254 = vld [vmem:[%s208] sm:$0xff]
        %v255 = vld [vmem:[%s208 + $0x8] sm:$0xff]
        %v256 = vld [vmem:[%s208 + $0x10] sm:$0xff]
        %v257 = vld [vmem:[%s208 + $0x18] sm:$0xff]
        %v258 = vld [vmem:[%s208 + $0x20] sm:$0xff]
        %v259 = vld [vmem:[%s208 + $0x28] sm:$0xff]
        %v260 = vld [vmem:[%s208 + $0x30] sm:$0xff]
        %v261 = vld [vmem:[%s208 + $0x38] sm:$0xff]
        %v262 = vld [vmem:[%s208 + $0x40] sm:$0xff]
        %v263 = vld [vmem:[%s208 + $0x48] sm:$0xff]
        %v264 = vld [vmem:[%s208 + $0x50] sm:$0xff]
        %v265 = vld [vmem:[%s208 + $0x58] sm:$0xff]
        %v266 = vld [vmem:[%s208 + $0x60] sm:$0xff]
        %v267 = vld [vmem:[%s208 + $0x68] sm:$0xff]
        %v268 = vld [vmem:[%s208 + $0x70] sm:$0xff]
        %v269 = vld [vmem:[%s208 + $0x78] sm:$0xff]
        %v270 = vld [vmem:[%s208 + $0x80] sm:$0xff]
        %v271 = vld [vmem:[%s208 + $0x88] sm:$0xff]
        %v272 = vld [vmem:[%s208 + $0x90] sm:$0xff]
        %v273 = vld [vmem:[%s208 + $0x98] sm:$0xff]
        %v274 = vld [vmem:[%s208 + $0xa0] sm:$0xff]
        %v275 = vld [vmem:[%s208 + $0xa8] sm:$0xff]
        %v276 = vld [vmem:[%s208 + $0xb0] sm:$0xff]
        %v277 = vld [vmem:[%s208 + $0xb8] sm:$0xff]
        %v278 = vld [vmem:[%s208 + $0xc0] sm:$0xff]
        %v279 = vld [vmem:[%s208 + $0xc8] sm:$0xff]
        %v280 = vld [vmem:[%s208 + $0xd0] sm:$0xff]
        %v281 = vld [vmem:[%s208 + $0xd8] sm:$0xff]
        %v282 = vld [vmem:[%s208 + $0xe0] sm:$0xff]
        %v283 = vld [vmem:[%s208 + $0xe8] sm:$0xff]
        %v284 = vld [vmem:[%s208 + $0xf0] sm:$0xff]
        %v285 = vld [vmem:[%s208 + $0xf8] sm:$0xff]
        %v286 = vld [vmem:[%s218] sm:$0xff]
        %v287 = vld [vmem:[%s218 + $0x8] sm:$0xff]
        %v288 = vld [vmem:[%s218 + $0x10] sm:$0xff]
        %v289 = vld [vmem:[%s218 + $0x18] sm:$0xff]
        %v290 = vld [vmem:[%s218 + $0x20] sm:$0xff]
        %v291 = vld [vmem:[%s218 + $0x28] sm:$0xff]
        %v292 = vld [vmem:[%s218 + $0x30] sm:$0xff]
        %v293 = vld [vmem:[%s218 + $0x38] sm:$0xff]
        %v294 = vld [vmem:[%s218 + $0x40] sm:$0xff]
        %v295 = vld [vmem:[%s218 + $0x48] sm:$0xff]
        %v296 = vld [vmem:[%s218 + $0x50] sm:$0xff]
        %v297 = vld [vmem:[%s218 + $0x58] sm:$0xff]
        %v298 = vld [vmem:[%s218 + $0x60] sm:$0xff]
        %v299 = vld [vmem:[%s218 + $0x68] sm:$0xff]
        %v300 = vld [vmem:[%s218 + $0x70] sm:$0xff]
        %v301 = vld [vmem:[%s218 + $0x78] sm:$0xff]
        %v302 = vld [vmem:[%s218 + $0x80] sm:$0xff]
        %v303 = vld [vmem:[%s218 + $0x88] sm:$0xff]
        %v304 = vld [vmem:[%s218 + $0x90] sm:$0xff]
        %v305 = vld [vmem:[%s218 + $0x98] sm:$0xff]
        %v306 = vld [vmem:[%s218 + $0xa0] sm:$0xff]
        %v307 = vld [vmem:[%s218 + $0xa8] sm:$0xff]
        %v308 = vld [vmem:[%s218 + $0xb0] sm:$0xff]
        %v309 = vld [vmem:[%s218 + $0xb8] sm:$0xff]
        %v310 = vld [vmem:[%s218 + $0xc0] sm:$0xff]
        %v311 = vld [vmem:[%s218 + $0xc8] sm:$0xff]
        %v312 = vld [vmem:[%s218 + $0xd0] sm:$0xff]
        %v313 = vld [vmem:[%s218 + $0xd8] sm:$0xff]
        %v314 = vld [vmem:[%s218 + $0xe0] sm:$0xff]
        %v315 = vld [vmem:[%s218 + $0xe8] sm:$0xff]
        %v316 = vld [vmem:[%s218 + $0xf0] sm:$0xff]
        %v317 = vld [vmem:[%s218 + $0xf8] sm:$0xff]
        %v318 = vld [vmem:[#allocation9] sm:$0xff]
        %v319 = vld [vmem:[#allocation9 + $0x8] sm:$0xff]
        %v320 = vld [vmem:[#allocation9 + $0x10] sm:$0xff]
        %v321 = vld [vmem:[#allocation9 + $0x18] sm:$0xff]
        %v322 = vmul.f32 %v254, %v254
        %v323 = vmul.f32 %v255, %v255
        %v324 = vmul.f32 %v256, %v256
        %v325 = vmul.f32 %v257, %v257
        %v326 = vmul.f32 %v258, %v258
        %v327 = vmul.f32 %v259, %v259
        %v328 = vmul.f32 %v260, %v260
        %v329 = vmul.f32 %v261, %v261
        %v330 = vmul.f32 %v262, %v262
        %v331 = vmul.f32 %v263, %v263
        %v332 = vmul.f32 %v264, %v264
        %v333 = vmul.f32 %v265, %v265
        %v334 = vmul.f32 %v266, %v266
        %v335 = vmul.f32 %v267, %v267
        %v336 = vmul.f32 %v268, %v268
        %v337 = vmul.f32 %v269, %v269
        %v338 = vmul.f32 %v270, %v270
        %v339 = vmul.f32 %v271, %v271
        %v340 = vmul.f32 %v272, %v272
        %v341 = vmul.f32 %v273, %v273
        %v342 = vmul.f32 %v274, %v274
        %v343 = vmul.f32 %v275, %v275
        %v344 = vmul.f32 %v276, %v276
        %v345 = vmul.f32 %v277, %v277
        %v346 = vmul.f32 %v278, %v278
        %v347 = vmul.f32 %v279, %v279
        %v348 = vmul.f32 %v280, %v280
        %v349 = vmul.f32 %v281, %v281
        %v350 = vmul.f32 %v282, %v282
        %v351 = vmul.f32 %v283, %v283
        %v352 = vmul.f32 %v284, %v284
        %v353 = vmul.f32 %v285, %v285
        %v354 = vmul.f32 %v286, %v286
        %v355 = vmul.f32 %v287, %v287
        %v356 = vmul.f32 %v288, %v288
        %v357 = vmul.f32 %v289, %v289
        %v358 = vmul.f32 %v290, %v290
        %v359 = vmul.f32 %v291, %v291
        %v360 = vmul.f32 %v292, %v292
        %v361 = vmul.f32 %v293, %v293
        %v362 = vmul.f32 %v294, %v294
        %v363 = vmul.f32 %v295, %v295
        %v364 = vmul.f32 %v296, %v296
        %v365 = vmul.f32 %v297, %v297
        %v366 = vmul.f32 %v298, %v298
        %v367 = vmul.f32 %v299, %v299
        %v368 = vmul.f32 %v300, %v300
        %v369 = vmul.f32 %v301, %v301
        %v370 = vmul.f32 %v302, %v302
        %v371 = vmul.f32 %v303, %v303
        %v372 = vmul.f32 %v304, %v304
        %v373 = vmul.f32 %v305, %v305
        %v374 = vmul.f32 %v306, %v306
        %v375 = vmul.f32 %v307, %v307
        %v376 = vmul.f32 %v308, %v308
        %v377 = vmul.f32 %v309, %v309
        %v378 = vmul.f32 %v310, %v310
        %v379 = vmul.f32 %v311, %v311
        %v380 = vmul.f32 %v312, %v312
        %v381 = vmul.f32 %v313, %v313
        %v382 = vmul.f32 %v314, %v314
        %v383 = vmul.f32 %v315, %v315
        %v384 = vmul.f32 %v316, %v316
        %v385 = vmul.f32 %v317, %v317
        %v386 = vadd.f32 %v322, %v354
        %v387 = vadd.f32 %v323, %v355
        %v388 = vadd.f32 %v324, %v356
        %v389 = vadd.f32 %v325, %v357
        %v390 = vadd.f32 %v326, %v358
        %v391 = vadd.f32 %v327, %v359
        %v392 = vadd.f32 %v328, %v360
        %v393 = vadd.f32 %v329, %v361
        %v394 = vadd.f32 %v330, %v362
        %v395 = vadd.f32 %v331, %v363
        %v396 = vadd.f32 %v332, %v364
        %v397 = vadd.f32 %v333, %v365
        %v398 = vadd.f32 %v334, %v366
        %v399 = vadd.f32 %v335, %v367
        %v400 = vadd.f32 %v336, %v368
        %v401 = vadd.f32 %v337, %v369
        %v402 = vadd.f32 %v338, %v370
        %v403 = vadd.f32 %v339, %v371
        %v404 = vadd.f32 %v340, %v372
        %v405 = vadd.f32 %v341, %v373
        %v406 = vadd.f32 %v342, %v374
        %v407 = vadd.f32 %v343, %v375
        %v408 = vadd.f32 %v344, %v376
        %v409 = vadd.f32 %v345, %v377
        %v410 = vadd.f32 %v346, %v378
        %v411 = vadd.f32 %v347, %v379
        %v412 = vadd.f32 %v348, %v380
        %v413 = vadd.f32 %v349, %v381
        %v414 = vadd.f32 %v350, %v382
        %v415 = vadd.f32 %v351, %v383
        %v416 = vadd.f32 %v352, %v384
        %v417 = vadd.f32 %v353, %v385
        %v418 = vtanh.pop %v386
        %v419 = vtanh.pop %v387
        %v420 = vtanh.pop %v388
        %v421 = vtanh.pop %v389
        %v422 = vtanh.pop %v390
        %v423 = vtanh.pop %v391
        %v424 = vtanh.pop %v392
        %v425 = vtanh.pop %v393
        %v426 = vtanh.pop %v394
        %v427 = vtanh.pop %v395
        %v428 = vtanh.pop %v396
        %v429 = vtanh.pop %v397
        %v430 = vtanh.pop %v398
        %v431 = vtanh.pop %v399
        %v432 = vtanh.pop %v400
        %v433 = vtanh.pop %v401
        %v434 = vtanh.pop %v402
        %v435 = vtanh.pop %v403
        %v436 = vtanh.pop %v404
        %v437 = vtanh.pop %v405
        %v438 = vtanh.pop %v406
        %v439 = vtanh.pop %v407
        %v440 = vtanh.pop %v408
        %v441 = vtanh.pop %v409
        %v442 = vtanh.pop %v410
        %v443 = vtanh.pop %v411
        %v444 = vtanh.pop %v412
        %v445 = vtanh.pop %v413
        %v446 = vtanh.pop %v414
        %v447 = vtanh.pop %v415
        %v448 = vtanh.pop %v416
        %v449 = vtanh.pop %v417
        %v450 = vmul.f32 %v418, 255.0
        %v451 = vmul.f32 %v419, 255.0
        %v452 = vmul.f32 %v420, 255.0
        %v453 = vmul.f32 %v421, 255.0
        %v454 = vmul.f32 %v422, 255.0
        %v455 = vmul.f32 %v423, 255.0
        %v456 = vmul.f32 %v424, 255.0
        %v457 = vmul.f32 %v425, 255.0
        %v458 = vmul.f32 %v426, 255.0
        %v459 = vmul.f32 %v427, 255.0
        %v460 = vmul.f32 %v428, 255.0
        %v461 = vmul.f32 %v429, 255.0
        %v462 = vmul.f32 %v430, 255.0
        %v463 = vmul.f32 %v431, 255.0
        %v464 = vmul.f32 %v432, 255.0
        %v465 = vmul.f32 %v433, 255.0
        %v466 = vmul.f32 %v434, 255.0
        %v467 = vmul.f32 %v435, 255.0
        %v468 = vmul.f32 %v436, 255.0
        %v469 = vmul.f32 %v437, 255.0
        %v470 = vmul.f32 %v438, 255.0
        %v471 = vmul.f32 %v439, 255.0
        %v472 = vmul.f32 %v440, 255.0
        %v473 = vmul.f32 %v441, 255.0
        %v474 = vmul.f32 %v442, 255.0
        %v475 = vmul.f32 %v443, 255.0
        %v476 = vmul.f32 %v444, 255.0
        %v477 = vmul.f32 %v445, 255.0
        %v478 = vmul.f32 %v446, 255.0
        %v479 = vmul.f32 %v447, 255.0
        %v480 = vmul.f32 %v448, 255.0
        %v481 = vmul.f32 %v449, 255.0
        %v482 = vadd.f32 %v450, 0.5
        %v483 = vadd.f32 %v451, 0.5
        %v484 = vadd.f32 %v452, 0.5
        %v485 = vadd.f32 %v453, 0.5
        %v486 = vadd.f32 %v454, 0.5
        %v487 = vadd.f32 %v455, 0.5
        %v488 = vadd.f32 %v456, 0.5
        %v489 = vadd.f32 %v457, 0.5
        %v490 = vadd.f32 %v458, 0.5
        %v491 = vadd.f32 %v459, 0.5
        %v492 = vadd.f32 %v460, 0.5
        %v493 = vadd.f32 %v461, 0.5
        %v494 = vadd.f32 %v462, 0.5
        %v495 = vadd.f32 %v463, 0.5
        %v496 = vadd.f32 %v464, 0.5
        %v497 = vadd.f32 %v465, 0.5
        %v498 = vadd.f32 %v466, 0.5
        %v499 = vadd.f32 %v467, 0.5
        %v500 = vadd.f32 %v468, 0.5
        %v501 = vadd.f32 %v469, 0.5
        %v502 = vadd.f32 %v470, 0.5
        %v503 = vadd.f32 %v471, 0.5
        %v504 = vadd.f32 %v472, 0.5
        %v505 = vadd.f32 %v473, 0.5
        %v506 = vadd.f32 %v474, 0.5
        %v507 = vadd.f32 %v475, 0.5
        %v508 = vadd.f32 %v476, 0.5
        %v509 = vadd.f32 %v477, 0.5
        %v510 = vadd.f32 %v478, 0.5
        %v511 = vadd.f32 %v479, 0.5
        %v512 = vadd.f32 %v480, 0.5
        %v513 = vadd.f32 %v481, 0.5
        %v514 = vfloor.f32 %v482
        %v515 = vfloor.f32 %v483
        %v516 = vfloor.f32 %v484
        %v517 = vfloor.f32 %v485
        %v518 = vfloor.f32 %v486
        %v519 = vfloor.f32 %v487
        %v520 = vfloor.f32 %v488
        %v521 = vfloor.f32 %v489
        %v522 = vfloor.f32 %v490
        %v523 = vfloor.f32 %v491
        %v524 = vfloor.f32 %v492
        %v525 = vfloor.f32 %v493
        %v526 = vfloor.f32 %v494
        %v527 = vfloor.f32 %v495
        %v528 = vfloor.f32 %v496
        %v529 = vfloor.f32 %v497
        %v530 = vfloor.f32 %v498
        %v531 = vfloor.f32 %v499
        %v532 = vfloor.f32 %v500
        %v533 = vfloor.f32 %v501
        %v534 = vfloor.f32 %v502
        %v535 = vfloor.f32 %v503
        %v536 = vfloor.f32 %v504
        %v537 = vfloor.f32 %v505
        %v538 = vfloor.f32 %v506
        %v539 = vfloor.f32 %v507
        %v540 = vfloor.f32 %v508
        %v541 = vfloor.f32 %v509
        %v542 = vfloor.f32 %v510
        %v543 = vfloor.f32 %v511
        %v544 = vfloor.f32 %v512
        %v545 = vfloor.f32 %v513
        %v546 = vmul.f32 %v514, 0.003921569
        %v547 = vmul.f32 %v515, 0.003921569
        %v548 = vmul.f32 %v516, 0.003921569
        %v549 = vmul.f32 %v517, 0.003921569
        %v550 = vmul.f32 %v518, 0.003921569
        %v551 = vmul.f32 %v519, 0.003921569
        %v552 = vmul.f32 %v520, 0.003921569
        %v553 = vmul.f32 %v521, 0.003921569
        %v554 = vmul.f32 %v522, 0.003921569
        %v555 = vmul.f32 %v523, 0.003921569
        %v556 = vmul.f32 %v524, 0.003921569
        %v557 = vmul.f32 %v525, 0.003921569
        %v558 = vmul.f32 %v526, 0.003921569
        %v559 = vmul.f32 %v527, 0.003921569
        %v560 = vmul.f32 %v528, 0.003921569
        %v561 = vmul.f32 %v529, 0.003921569
        %v562 = vmul.f32 %v530, 0.003921569
        %v563 = vmul.f32 %v531, 0.003921569
        %v564 = vmul.f32 %v532, 0.003921569
        %v565 = vmul.f32 %v533, 0.003921569
        %v566 = vmul.f32 %v534, 0.003921569
        %v567 = vmul.f32 %v535, 0.003921569
        %v568 = vmul.f32 %v536, 0.003921569
        %v569 = vmul.f32 %v537, 0.003921569
        %v570 = vmul.f32 %v538, 0.003921569
        %v571 = vmul.f32 %v539, 0.003921569
        %v572 = vmul.f32 %v540, 0.003921569
        %v573 = vmul.f32 %v541, 0.003921569
        %v574 = vmul.f32 %v542, 0.003921569
        %v575 = vmul.f32 %v543, 0.003921569
        %v576 = vmul.f32 %v544, 0.003921569
        %v577 = vmul.f32 %v545, 0.003921569
        %v582 = vperm.slane %v318, 0
        %v583 = vperm.slane %v318, 1
        %v584 = vperm.slane %v318, 2
        %v585 = vperm.slane %v318, 3
        %v586 = vperm.slane %v318, 4
        %v587 = vperm.slane %v318, 5
        %v588 = vperm.slane %v318, 6
        %v589 = vperm.slane %v318, 7
        %v590 = vperm.slane %v319, 0
        %v591 = vperm.slane %v319, 1
        %v592 = vperm.slane %v319, 2
        %v593 = vperm.slane %v319, 3
        %v594 = vperm.slane %v319, 4
        %v595 = vperm.slane %v319, 5
        %v596 = vperm.slane %v319, 6
        %v597 = vperm.slane %v319, 7
        %v598 = vperm.slane %v320, 0
        %v599 = vperm.slane %v320, 1
        %v600 = vperm.slane %v320, 2
        %v601 = vperm.slane %v320, 3
        %v602 = vperm.slane %v320, 4
        %v603 = vperm.slane %v320, 5
        %v604 = vperm.slane %v320, 6
        %v605 = vperm.slane %v320, 7
        %v606 = vperm.slane %v321, 0
        %v607 = vperm.slane %v321, 1
        %v608 = vperm.slane %v321, 2
        %v609 = vperm.slane %v321, 3
        %v610 = vperm.slane %v321, 4
        %v611 = vperm.slane %v321, 5
        %v612 = vperm.slane %v321, 6
        %v613 = vperm.slane %v321, 7
        %v646 = vmul.f32 %v546, %v582
        %v647 = vmul.f32 %v547, %v583
        %v648 = vmul.f32 %v548, %v584
        %v649 = vmul.f32 %v549, %v585
        %v650 = vmul.f32 %v550, %v586
        %v651 = vmul.f32 %v551, %v587
        %v652 = vmul.f32 %v552, %v588
        %v653 = vmul.f32 %v553, %v589
        %v654 = vmul.f32 %v554, %v590
        %v655 = vmul.f32 %v555, %v591
        %v656 = vmul.f32 %v556, %v592
        %v657 = vmul.f32 %v557, %v593
        %v658 = vmul.f32 %v558, %v594
        %v659 = vmul.f32 %v559, %v595
        %v660 = vmul.f32 %v560, %v596
        %v661 = vmul.f32 %v561, %v597
        %v662 = vmul.f32 %v562, %v598
        %v663 = vmul.f32 %v563, %v599
        %v664 = vmul.f32 %v564, %v600
        %v665 = vmul.f32 %v565, %v601
        %v666 = vmul.f32 %v566, %v602
        %v667 = vmul.f32 %v567, %v603
        %v668 = vmul.f32 %v568, %v604
        %v669 = vmul.f32 %v569, %v605
        %v670 = vmul.f32 %v570, %v606
        %v671 = vmul.f32 %v571, %v607
        %v672 = vmul.f32 %v572, %v608
        %v673 = vmul.f32 %v573, %v609
        %v674 = vmul.f32 %v574, %v610
        %v675 = vmul.f32 %v575, %v611
        %v676 = vmul.f32 %v576, %v612
        %v677 = vmul.f32 %v577, %v613
        %v678 = vadd.f32 %v646, %v647
        %v679 = vadd.f32 %v678, %v648
        %v680 = vadd.f32 %v679, %v649
        %v681 = vadd.f32 %v680, %v650
        %v682 = vadd.f32 %v681, %v651
        %v683 = vadd.f32 %v682, %v652
        %v684 = vadd.f32 %v683, %v653
        %v685 = vadd.f32 %v684, %v654
        %v686 = vadd.f32 %v685, %v655
        %v687 = vadd.f32 %v686, %v656
        %v688 = vadd.f32 %v687, %v657
        %v689 = vadd.f32 %v688, %v658
        %v690 = vadd.f32 %v689, %v659
        %v691 = vadd.f32 %v690, %v660
        %v692 = vadd.f32 %v691, %v661
        %v693 = vadd.f32 %v692, %v662
        %v694 = vadd.f32 %v693, %v663
        %v695 = vadd.f32 %v694, %v664
        %v696 = vadd.f32 %v695, %v665
        %v697 = vadd.f32 %v696, %v666
        %v698 = vadd.f32 %v697, %v667
        %v699 = vadd.f32 %v698, %v668
        %v700 = vadd.f32 %v699, %v669
        %v701 = vadd.f32 %v700, %v670
        %v702 = vadd.f32 %v701, %v671
        %v703 = vadd.f32 %v702, %v672
        %v704 = vadd.f32 %v703, %v673
        %v705 = vadd.f32 %v704, %v674
        %v706 = vadd.f32 %v705, %v675
        %v707 = vadd.f32 %v706, %v676
        %v708 = vadd.f32 %v707, %v677
        %709 = vadd.xlane.f32.xlu0 %v708
        %v710 = vpop.xlane.xlu0 %709
        %v711 = vrcp.pop 4096.0
        %v712 = vmul.f32 4096.0, %v711
        %v713 = vsub.f32 1.0, %v712
        %v714 = vmul.f32 %v711, %v713
        %v715 = vadd.f32 %v711, %v714
        %vm716 = vweird.f32 %v711
        %v717 = vsel %vm716, %v711, %v715
        %v718 = vmul.f32 %v710, %v717
        %v719 = vstv %s252
        %v720 = vmul.f32 %v719, %v718
        %v721 = vsub.f32 %v646, %v720
        %v722 = vsub.f32 %v647, %v720
        %v723 = vsub.f32 %v648, %v720
        %v724 = vsub.f32 %v649, %v720
        %v725 = vsub.f32 %v650, %v720
        %v726 = vsub.f32 %v651, %v720
        %v727 = vsub.f32 %v652, %v720
        %v728 = vsub.f32 %v653, %v720
        %v729 = vsub.f32 %v654, %v720
        %v730 = vsub.f32 %v655, %v720
        %v731 = vsub.f32 %v656, %v720
        %v732 = vsub.f32 %v657, %v720
        %v733 = vsub.f32 %v658, %v720
        %v734 = vsub.f32 %v659, %v720
        %v735 = vsub.f32 %v660, %v720
        %v736 = vsub.f32 %v661, %v720
        %v737 = vsub.f32 %v662, %v720
        %v738 = vsub.f32 %v663, %v720
        %v739 = vsub.f32 %v664, %v720
        %v740 = vsub.f32 %v665, %v720
        %v741 = vsub.f32 %v666, %v720
        %v742 = vsub.f32 %v667, %v720
        %v743 = vsub.f32 %v668, %v720
        %v744 = vsub.f32 %v669, %v720
        %v745 = vsub.f32 %v670, %v720
        %v746 = vsub.f32 %v671, %v720
        %v747 = vsub.f32 %v672, %v720
        %v748 = vsub.f32 %v673, %v720
        %v749 = vsub.f32 %v674, %v720
        %v750 = vsub.f32 %v675, %v720
        %v751 = vsub.f32 %v676, %v720
        %v752 = vsub.f32 %v677, %v720
        %v753 = vstv %s253
        %v754 = vmul.f32 %v753, %v721
        %v755 = vmul.f32 %v753, %v722
        %v756 = vmul.f32 %v753, %v723
        %v757 = vmul.f32 %v753, %v724
        %v758 = vmul.f32 %v753, %v725
        %v759 = vmul.f32 %v753, %v726
        %v760 = vmul.f32 %v753, %v727
        %v761 = vmul.f32 %v753, %v728
        %v762 = vmul.f32 %v753, %v729
        %v763 = vmul.f32 %v753, %v730
        %v764 = vmul.f32 %v753, %v731
        %v765 = vmul.f32 %v753, %v732
        %v766 = vmul.f32 %v753, %v733
        %v767 = vmul.f32 %v753, %v734
        %v768 = vmul.f32 %v753, %v735
        %v769 = vmul.f32 %v753, %v736
        %v770 = vmul.f32 %v753, %v737
        %v771 = vmul.f32 %v753, %v738
        %v772 = vmul.f32 %v753, %v739
        %v773 = vmul.f32 %v753, %v740
        %v774 = vmul.f32 %v753, %v741
        %v775 = vmul.f32 %v753, %v742
        %v776 = vmul.f32 %v753, %v743
        %v777 = vmul.f32 %v753, %v744
        %v778 = vmul.f32 %v753, %v745
        %v779 = vmul.f32 %v753, %v746
        %v780 = vmul.f32 %v753, %v747
        %v781 = vmul.f32 %v753, %v748
        %v782 = vmul.f32 %v753, %v749
        %v783 = vmul.f32 %v753, %v750
        %v784 = vmul.f32 %v753, %v751
        %v785 = vmul.f32 %v753, %v752
        %vm786 = vcmp.ge.f32.partialorder %v754, 0.0
        %vm787 = vcmp.ge.f32.partialorder %v755, 0.0
        %vm788 = vcmp.ge.f32.partialorder %v756, 0.0
        %vm789 = vcmp.ge.f32.partialorder %v757, 0.0
        %vm790 = vcmp.ge.f32.partialorder %v758, 0.0
        %vm791 = vcmp.ge.f32.partialorder %v759, 0.0
        %vm792 = vcmp.ge.f32.partialorder %v760, 0.0
        %vm793 = vcmp.ge.f32.partialorder %v761, 0.0
        %vm794 = vcmp.ge.f32.partialorder %v762, 0.0
        %vm795 = vcmp.ge.f32.partialorder %v763, 0.0
        %vm796 = vcmp.ge.f32.partialorder %v764, 0.0
        %vm797 = vcmp.ge.f32.partialorder %v765, 0.0
        %vm798 = vcmp.ge.f32.partialorder %v766, 0.0
        %vm799 = vcmp.ge.f32.partialorder %v767, 0.0
        %vm800 = vcmp.ge.f32.partialorder %v768, 0.0
        %vm801 = vcmp.ge.f32.partialorder %v769, 0.0
        %vm802 = vcmp.ge.f32.partialorder %v770, 0.0
        %vm803 = vcmp.ge.f32.partialorder %v771, 0.0
        %vm804 = vcmp.ge.f32.partialorder %v772, 0.0
        %vm805 = vcmp.ge.f32.partialorder %v773, 0.0
        %vm806 = vcmp.ge.f32.partialorder %v774, 0.0
        %vm807 = vcmp.ge.f32.partialorder %v775, 0.0
        %vm808 = vcmp.ge.f32.partialorder %v776, 0.0
        %vm809 = vcmp.ge.f32.partialorder %v777, 0.0
        %vm810 = vcmp.ge.f32.partialorder %v778, 0.0
        %vm811 = vcmp.ge.f32.partialorder %v779, 0.0
        %vm812 = vcmp.ge.f32.partialorder %v780, 0.0
        %vm813 = vcmp.ge.f32.partialorder %v781, 0.0
        %vm814 = vcmp.ge.f32.partialorder %v782, 0.0
        %vm815 = vcmp.ge.f32.partialorder %v783, 0.0
        %vm816 = vcmp.ge.f32.partialorder %v784, 0.0
        %vm817 = vcmp.ge.f32.partialorder %v785, 0.0
        %v818 = vsel %vm786, %v582, 0.0
        %v819 = vsel %vm787, %v583, 0.0
        %v820 = vsel %vm788, %v584, 0.0
        %v821 = vsel %vm789, %v585, 0.0
        %v822 = vsel %vm790, %v586, 0.0
        %v823 = vsel %vm791, %v587, 0.0
        %v824 = vsel %vm792, %v588, 0.0
        %v825 = vsel %vm793, %v589, 0.0
        %v826 = vsel %vm794, %v590, 0.0
        %v827 = vsel %vm795, %v591, 0.0
        %v828 = vsel %vm796, %v592, 0.0
        %v829 = vsel %vm797, %v593, 0.0
        %v830 = vsel %vm798, %v594, 0.0
        %v831 = vsel %vm799, %v595, 0.0
        %v832 = vsel %vm800, %v596, 0.0
        %v833 = vsel %vm801, %v597, 0.0
        %v834 = vsel %vm802, %v598, 0.0
        %v835 = vsel %vm803, %v599, 0.0
        %v836 = vsel %vm804, %v600, 0.0
        %v837 = vsel %vm805, %v601, 0.0
        %v838 = vsel %vm806, %v602, 0.0
        %v839 = vsel %vm807, %v603, 0.0
        %v840 = vsel %vm808, %v604, 0.0
        %v841 = vsel %vm809, %v605, 0.0
        %v842 = vsel %vm810, %v606, 0.0
        %v843 = vsel %vm811, %v607, 0.0
        %v844 = vsel %vm812, %v608, 0.0
        %v845 = vsel %vm813, %v609, 0.0
        %v846 = vsel %vm814, %v610, 0.0
        %v847 = vsel %vm815, %v611, 0.0
        %v848 = vsel %vm816, %v612, 0.0
        %v849 = vsel %vm817, %v613, 0.0
        %850 = vst [vmem:[%s251] sm:$0xff] %v818
        %851 = vst [vmem:[%s251 + $0x8] sm:$0xff] %v819
        %852 = vst [vmem:[%s251 + $0x10] sm:$0xff] %v820
        %853 = vst [vmem:[%s251 + $0x18] sm:$0xff] %v821
        %854 = vst [vmem:[%s251 + $0x20] sm:$0xff] %v822
        %855 = vst [vmem:[%s251 + $0x28] sm:$0xff] %v823
        %856 = vst [vmem:[%s251 + $0x30] sm:$0xff] %v824
        %857 = vst [vmem:[%s251 + $0x38] sm:$0xff] %v825
        %858 = vst [vmem:[%s251 + $0x40] sm:$0xff] %v826
        %859 = vst [vmem:[%s251 + $0x48] sm:$0xff] %v827
        %860 = vst [vmem:[%s251 + $0x50] sm:$0xff] %v828
        %861 = vst [vmem:[%s251 + $0x58] sm:$0xff] %v829
        %862 = vst [vmem:[%s251 + $0x60] sm:$0xff] %v830
        %863 = vst [vmem:[%s251 + $0x68] sm:$0xff] %v831
        %864 = vst [vmem:[%s251 + $0x70] sm:$0xff] %v832
        %865 = vst [vmem:[%s251 + $0x78] sm:$0xff] %v833
        %866 = vst [vmem:[%s251 + $0x80] sm:$0xff] %v834
        %867 = vst [vmem:[%s251 + $0x88] sm:$0xff] %v835
        %868 = vst [vmem:[%s251 + $0x90] sm:$0xff] %v836
        %869 = vst [vmem:[%s251 + $0x98] sm:$0xff] %v837
        %870 = vst [vmem:[%s251 + $0xa0] sm:$0xff] %v838
        %871 = vst [vmem:[%s251 + $0xa8] sm:$0xff] %v839
        %872 = vst [vmem:[%s251 + $0xb0] sm:$0xff] %v840
        %873 = vst [vmem:[%s251 + $0xb8] sm:$0xff] %v841
        %874 = vst [vmem:[%s251 + $0xc0] sm:$0xff] %v842
        %875 = vst [vmem:[%s251 + $0xc8] sm:$0xff] %v843
        %876 = vst [vmem:[%s251 + $0xd0] sm:$0xff] %v844
        %877 = vst [vmem:[%s251 + $0xd8] sm:$0xff] %v845
        %878 = vst [vmem:[%s251 + $0xe0] sm:$0xff] %v846
        %879 = vst [vmem:[%s251 + $0xe8] sm:$0xff] %v847
        %880 = vst [vmem:[%s251 + $0xf0] sm:$0xff] %v848
        %881 = vst [vmem:[%s251 + $0xf8] sm:$0xff] %v849
        %s882 = sand.u32 %s113, 1
        %s883 = scalar_lea.sflag [#allocation6], %s882
        %s884 = sand.u32 %s113, 1
        %s885 = smul.addr %s884, 256
        %s886 = scalar_lea.vmem [#allocation10], %s885
        // Predicated region
        $region45: #{tpu_custom_call.1} parent=31 // pred_check
          %p887 = pneg %p123
        $region46: #{tpu_custom_call.1} parent=31 // pred_check_branch
          %889 = sbr.rel (%p887) target = $region48
        $region47: #{tpu_custom_call.1} parent=31 // pred_region
          %891 = vsyncadd %s883, 0
          %s892 = smul.addr %s32, 32
          %s893 = smul.addr %s892, 8
          %s894 = scalar_lea.hbm %s4, %s893
          %s896 = sshll.u32 %s886, 4
          %s897 = int_to_ptr.vmem [resolvable:$true] %s896
          %s898 = sshll.u32 %s894, 4
          %s899 = int_to_ptr.hbm [resolvable:$true] %s898
          %901 = dma.vmem_to_hbm [thread:$0]  %s897, 4096, %s899, %s883
        $region48: #{tpu_custom_call.1} parent=31 // pred_fallthru
          _
      $region32: #{tpu_custom_call.1} parent=5 // pred_fallthru
        _
      %p902 = scmp.le.s32.totalorder 2, %s27
      // Predicated region
      $region49: #{tpu_custom_call.1} parent=5 // pred_check
        %p903 = pneg %p902
      $region50: #{tpu_custom_call.1} parent=5 // pred_check_branch
        %905 = sbr.rel (%p903) target = $region52
      $region51: #{tpu_custom_call.1} parent=5 // pred_region
        %s906 = ssub.s32 %s27, 2
        // Predicated region
        $region53: #{tpu_custom_call.1} parent=51 // pred_check
          %p907 = pneg %p129
        $region54: #{tpu_custom_call.1} parent=51 // pred_check_branch
          %909 = sbr.rel (%p907) target = $region56
        $region55: #{tpu_custom_call.1} parent=51 // pred_region
          %s910 = sand.u32 %s114, 1
          %s911 = scalar_lea.sflag [#allocation6], %s910
          %s912 = sand.u32 %s114, 1
          %s913 = smul.addr %s912, 256
          %s914 = scalar_lea.vmem [#allocation10], %s913
          %916 = dma.done %s911, 4096
        $region56: #{tpu_custom_call.1} parent=51 // pred_fallthru
          _
      $region52: #{tpu_custom_call.1} parent=5 // pred_fallthru
        _
    $region6: #{tpu_custom_call.1} parent=1 // loop_footer
      %s31 = sadd.s32 1, %s27
    $region7: #{tpu_custom_call.1} parent=1 // loop_footer_branch
      %26 = sbr.rel target = $region3
    $region8: #{tpu_custom_call.1} parent=1 // loop_exit
      _
    %917 = vsyncpa [#allocation5], 1
    %s918 = scalar_lea.sflag [#allocation5], 1
    %919 = vsyncpa %s918, 1
    %920 = vsyncpa [#allocation8], 1
    %s921 = scalar_lea.sflag [#allocation8], 1
    %922 = vsyncpa %s921, 1
    %923 = vsyncpa [#allocation6], 1
    %s924 = scalar_lea.sflag [#allocation6], 1
    %925 = vsyncpa %s924, 1

</llo_original>
